<compile_context>
chip_gen: v7x
topology: tpu7x:2x2x1
jax: 0.10.0
libtpu: 0.0.40
codegen_flags: <defaults>
</compile_context>

<pallas_src>
import math

import numpy as np
import jax
import jax.numpy as jnp
from jax.experimental import pallas as pl
from jax.experimental.pallas import tpu as pltpu

_LANES = 128
_SUBLANES = 8
_HIGHEST = jax.lax.Precision.HIGHEST


# ----------------------------------------------------------------------------
# Pallas kernels: pointwise (1x1x1) conv as a channel contraction.
# ----------------------------------------------------------------------------
def _pw_conv_vpu_kernel(x_ref, w_ref, b_ref, o_ref):
    """VPU path for small channel counts (Cin*Cout small).

    x_ref: (Cin, TR, 128) VMEM f32  -- dense (sublane, lane) tiles
    w_ref: (Cout, Cin)    SMEM f32
    b_ref: (Cout,)        SMEM f32
    o_ref: (Cout, TR, 128) VMEM f32
    """
    cin, tr, _ = x_ref.shape
    cout = o_ref.shape[0]

    # Rows of 128 lanes processed per inner step.  Live set per step is about
    # (cin + 1) * ch / 8 vregs -- well under the 64-vreg file, so the
    # accumulation never spills while every store stays a full unmasked vreg.
    ch = 8
    ch_cap = min(32, max(8, 8 * (48 // (cin + 1))))
    while ch * 2 <= ch_cap and tr % (ch * 2) == 0:
        ch *= 2
    nch = tr // ch

    def body(c, carry):
        r0 = pl.multiple_of(c * ch, 8)
        xs = [x_ref[ci, pl.ds(r0, ch), :] for ci in range(cin)]   # (ch,128) each
        for co in range(cout):                                     # static unroll
            acc = xs[0] * w_ref[co, 0] + b_ref[co]
            for ci in range(1, cin):
                acc = acc + xs[ci] * w_ref[co, ci]
            o_ref[co, pl.ds(r0, ch), :] = acc
        return carry

    jax.lax.fori_loop(0, nch, body, 0, unroll=nch <= 8)


def _pw_conv_mxu_kernel(x_ref, w_ref, b_ref, o_ref):
    """MXU path for large channel counts.

    x_ref: (Cin, T) VMEM f32, w_ref: (Cout, Cin) VMEM, b_ref: (Cout, 1) VMEM.
    """
    acc = jnp.dot(w_ref[...], x_ref[...], preferred_element_type=jnp.float32)
    o_ref[...] = (acc + b_ref[...]).astype(o_ref.dtype)


# ----------------------------------------------------------------------------
# Tile-size selection (VMEM-budgeted, multi-step grids for megacore/pipeline)
# ----------------------------------------------------------------------------
def _pick_tile_rows(R, B, cin, cout, dtype_bytes=4,
                    vmem_budget_bytes=8 * 1024 * 1024, min_total_steps=8):
    """Rows (of 128 lanes) per block: multiple of 8, divides R, keeps the
    double-buffered in+out blocks under a conservative VMEM budget (safe on
    v7x's 64 MiB VMEM), and leaves >= min_total_steps grid steps when possible
    so both v7x TensorCores get a pipelined multi-step stream."""
    bytes_per_row = (cin + cout) * _LANES * dtype_bytes
    cap_vmem = vmem_budget_bytes // (2 * bytes_per_row)
    steps_per_batch = max(1, -(-min_total_steps // max(B, 1)))
    cap_steps = R // steps_per_batch
    cap = max(8, min(cap_vmem, cap_steps))
    best, t = 8, 16
    while t <= min(cap, R):
        if R % t == 0:
            best = t
        t += 8
    return min(best, R)


def _pick_tile_lanes(S_pad, B, cin, cout, dtype_bytes=4,
                     vmem_budget_bytes=8 * 1024 * 1024, min_total_steps=8):
    """Flat spatial tile (multiple of 128) for the MXU path."""
    bytes_per_lane = (cin + cout) * dtype_bytes
    cap_vmem = vmem_budget_bytes // (2 * bytes_per_lane)
    steps_per_batch = max(1, -(-min_total_steps // max(B, 1)))
    cap_steps = S_pad // steps_per_batch
    cap = max(_LANES, min(cap_vmem, cap_steps))
    best, t = _LANES, 2 * _LANES
    while t <= min(cap, S_pad):
        if S_pad % t == 0:
            best = t
        t += _LANES
    return min(best, S_pad)


# ----------------------------------------------------------------------------
# Pointwise conv wrapper
# ----------------------------------------------------------------------------
def pointwise_conv_pallas(x3, w, b):
    """x3: (B, Cin, S), w: (Cout, Cin), b: (Cout,) -> (B, Cout, S) float32."""
    x3 = x3.astype(jnp.float32)
    w = w.astype(jnp.float32)
    b = b.astype(jnp.float32)
    B, Cin, S = x3.shape
    Cout = w.shape[0]

    # Pad the flattened spatial axis to a multiple of 8*128 so every tile is a
    # dense (8k, 128) block: lane-dense unmasked stores, bounded VMEM blocks.
    blk = _SUBLANES * _LANES
    S_pad = ((S + blk - 1) // blk) * blk
    if S_pad != S:
        x3 = jnp.pad(x3, ((0, 0), (0, 0), (0, S_pad - S)))

    use_mxu = (Cin * Cout > 64) or (Cout >= 16)
    cparams = pltpu.CompilerParams(
        dimension_semantics=("parallel", "parallel"),
        vmem_limit_bytes=32 * 1024 * 1024)

    if use_mxu:
        tile_s = _pick_tile_lanes(S_pad, B, Cin, Cout)
        grid = (B, S_pad // tile_s)
        out = pl.pallas_call(
            _pw_conv_mxu_kernel,
            out_shape=jax.ShapeDtypeStruct((B, Cout, S_pad), jnp.float32),
            grid_spec=pltpu.PrefetchScalarGridSpec(
                num_scalar_prefetch=0,
                grid=grid,
                in_specs=[
                    pl.BlockSpec((None, Cin, tile_s), lambda ib, is_: (ib, 0, is_)),
                    pl.BlockSpec((Cout, Cin), lambda ib, is_: (0, 0)),
                    pl.BlockSpec((Cout, 1), lambda ib, is_: (0, 0)),
                ],
                out_specs=pl.BlockSpec((None, Cout, tile_s),
                                       lambda ib, is_: (ib, 0, is_)),
            ),
            compiler_params=cparams,
        )(x3, w, b.reshape(Cout, 1))
    else:
        R = S_pad // _LANES
        tile_rows = _pick_tile_rows(R, B, Cin, Cout)
        x4 = x3.reshape(B, Cin, R, _LANES)
        grid = (B, R // tile_rows)
        out4 = pl.pallas_call(
            _pw_conv_vpu_kernel,
            out_shape=jax.ShapeDtypeStruct((B, Cout, R, _LANES), jnp.float32),
            grid_spec=pltpu.PrefetchScalarGridSpec(
                num_scalar_prefetch=0,
                grid=grid,
                in_specs=[
                    pl.BlockSpec((None, Cin, tile_rows, _LANES),
                                 lambda ib, ir: (ib, 0, ir, 0)),
                    # Constant small params live in SMEM: no buffered VMEM blocks.
                    pl.BlockSpec(memory_space=pltpu.MemorySpace.SMEM),
                    pl.BlockSpec(memory_space=pltpu.MemorySpace.SMEM),
                ],
                out_specs=pl.BlockSpec((None, Cout, tile_rows, _LANES),
                                       lambda ib, ir: (ib, 0, ir, 0)),
            ),
            compiler_params=cparams,
        )(x4, w, b)
        out = out4.reshape(B, Cout, S_pad)

    if S_pad != S:
        out = out[:, :, :S]
    return out


# ----------------------------------------------------------------------------
# Spectral corner truncation via truncated DFT matmuls (exact irfftn(mask*rfftn))
# ----------------------------------------------------------------------------
def _kept_modes_full_axis(D, h):
    """Indices kept along a full-FFT axis: [:h] and [-h:] (numpy -0: == all)."""
    m = np.zeros((D,), dtype=bool)
    m[:h] = True
    m[-h:] = True
    return np.nonzero(m)[0]


def _axis_truncation_operator(D, h):
    """T = IFFT @ diag(mask) @ FFT along a full-FFT axis; returns (Re, Im) or
    None when the kept set is the whole axis (T == identity)."""
    kept = _kept_modes_full_axis(D, h)
    if kept.size == D:
        return None
    n = np.arange(D, dtype=np.float64)
    W = np.exp(-2j * np.pi * np.outer(kept.astype(np.float64), n) / D)  # (K, D)
    T = (np.conj(W).T @ W) / D                                           # (D, D)
    return np.real(T).astype(np.float32), np.imag(T).astype(np.float32)


def _spectral_truncation_matmul(y, h1, h2, h3):
    """Exact equivalent of irfftn(corner_mask * rfftn(y)) when the output size
    equals y's spatial size, as truncated DFT matmuls (MXU) instead of FFTs."""
    B, C, D1, D2, D3 = y.shape
    F3 = D3 // 2 + 1
    K3 = min(max(h3, 0), F3)
    if K3 == 0:
        return jnp.zeros_like(y)

    # rfft analysis along the last axis restricted to the kept bins [0, K3).
    k3 = np.arange(K3, dtype=np.float64)
    n3 = np.arange(D3, dtype=np.float64)
    ang = 2.0 * np.pi * np.outer(n3, k3) / D3                 # (D3, K3)
    Ar = np.cos(ang).astype(np.float32)
    Ai = (-np.sin(ang)).astype(np.float32)
    # irfft synthesis weights (Im of DC/Nyquist bins drop out via sin==0).
    wgt = np.full((K3,), 2.0, dtype=np.float64)
    wgt[0] = 1.0
    if D3 % 2 == 0 and K3 == F3:
        wgt[-1] = 1.0
    Sr = ((wgt[:, None] * np.cos(ang.T)) / D3).astype(np.float32)   # (K3, D3)
    Si = ((-wgt[:, None] * np.sin(ang.T)) / D3).astype(np.float32)

    zr = jnp.einsum('bcxyz,zk->bcxyk', y, jnp.asarray(Ar), precision=_HIGHEST)
    zi = jnp.einsum('bcxyz,zk->bcxyk', y, jnp.asarray(Ai), precision=_HIGHEST)

    t1 = _axis_truncation_operator(D1, h1)
    if t1 is not None:
        t1r, t1i = jnp.asarray(t1[0]), jnp.asarray(t1[1])
        zr, zi = (
            jnp.einsum('nm,bcmyk->bcnyk', t1r, zr, precision=_HIGHEST)
            - jnp.einsum('nm,bcmyk->bcnyk', t1i, zi, precision=_HIGHEST),
            jnp.einsum('nm,bcmyk->bcnyk', t1r, zi, precision=_HIGHEST)
            + jnp.einsum('nm,bcmyk->bcnyk', t1i, zr, precision=_HIGHEST))

    t2 = _axis_truncation_operator(D2, h2)
    if t2 is not None:
        t2r, t2i = jnp.asarray(t2[0]), jnp.asarray(t2[1])
        zr, zi = (
            jnp.einsum('nm,bcxmk->bcxnk', t2r, zr, precision=_HIGHEST)
            - jnp.einsum('nm,bcxmk->bcxnk', t2i, zi, precision=_HIGHEST),
            jnp.einsum('nm,bcxmk->bcxnk', t2r, zi, precision=_HIGHEST)
            + jnp.einsum('nm,bcxmk->bcxnk', t2i, zr, precision=_HIGHEST))

    return (jnp.einsum('bcxyk,kz->bcxyz', zr, jnp.asarray(Sr), precision=_HIGHEST)
            + jnp.einsum('bcxyk,kz->bcxyz', zi, jnp.asarray(Si), precision=_HIGHEST))


# ----------------------------------------------------------------------------
# Full forward pass of pointwise_op_3D
# ----------------------------------------------------------------------------
def pointwise_op_3d_forward(x, w, b, dim1, dim2, dim3):
    """
    x: (B, C_in, D1, D2, D3)   (NCDHW, like PyTorch Conv3d input)
    w: (C_out, C_in), b: (C_out,)   (1x1x1 Conv3d weight/bias, squeezed)
    returns: (B, C_out, dim1, dim2, dim3) float32
    """
    x = x.astype(jnp.float32)
    w = w.astype(jnp.float32)
    b = b.astype(jnp.float32)
    B, Cin, D1, D2, D3 = x.shape
    Cout = w.shape[0]
    S = D1 * D2 * D3

    # --- 1x1x1 Conv3d as a Pallas channel contraction in native layout ---
    y3 = pointwise_conv_pallas(x.reshape(B, Cin, S), w, b)       # (B, Cout, S)
    x_out = y3.reshape(B, Cout, D1, D2, D3)

    h1, h2, h3 = dim1 // 2, dim2 // 2, dim3 // 2

    if (D1, D2, D3) == (dim1, dim2, dim3) and max(D1, D2, D3) <= 128:
        # Spectral corner low-pass via truncated DFT matmuls on the MXU: only
        # kept modes are formed, avoiding the XLA small-FFT path entirely.
        x_out = _spectral_truncation_matmul(x_out, h1, h2, h3)
    else:
        # General fallback (spectral resampling / large axes).
        # TODO(synk): no Pallas FFT primitive on TPU; rfftn/irfftn stay XLA ops.
        ft = jnp.fft.rfftn(x_out, axes=(-3, -2, -1))
        F1, F2, F3 = ft.shape[-3:]
        mask_np = np.zeros((F1, F2, F3), dtype=np.float32)
        mask_np[:h1, :h2, :h3] = 1.0
        mask_np[-h1:, :h2, :h3] = 1.0
        mask_np[:h1, -h2:, :h3] = 1.0
        mask_np[-h1:, -h2:, :h3] = 1.0
        ft = ft * jnp.asarray(mask_np)[None, None]
        x_out = jnp.fft.irfftn(ft, s=(dim1, dim2, dim3), axes=(-3, -2, -1))

    # F.interpolate(size=(dim1,dim2,dim3), mode='trilinear', align_corners=True)
    # on an input that already has exactly that size is the identity -> no-op.
    return x_out.astype(jnp.float32)


# ----------------------------------------------------------------------------
# Pure-jnp reference (conv via einsum, truncation via rfftn/scatter/irfftn)
# ----------------------------------------------------------------------------
def _reference_forward(x, w, b, dim1, dim2, dim3):
    x_out = (jnp.einsum('bcxyz,oc->boxyz', x, w, precision=_HIGHEST)
             + b[None, :, None, None, None])
    ft = jnp.fft.rfftn(x_out, axes=(-3, -2, -1))
    h1, h2, h3 = dim1 // 2, dim2 // 2, dim3 // 2
    ft_u = jnp.zeros_like(ft)
    ft_u = ft_u.at[:, :, :h1, :h2, :h3].set(ft[:, :, :h1, :h2, :h3])
    ft_u = ft_u.at[:, :, -h1:, :h2, :h3].set(ft[:, :, -h1:, :h2, :h3])
    ft_u = ft_u.at[:, :, :h1, -h2:, :h3].set(ft[:, :, :h1, -h2:, :h3])
    ft_u = ft_u.at[:, :, -h1:, -h2:, :h3].set(ft[:, :, -h1:, -h2:, :h3])
    out = jnp.fft.irfftn(ft_u, s=(dim1, dim2, dim3), axes=(-3, -2, -1))
    return out.astype(jnp.float32)


if __name__ == "__main__":
    # Small shapes consistent with the module: B=2, in_codim=4, out_codim=6, 8^3
    B, Cin, Cout = 2, 4, 6
    D1 = D2 = D3 = 8
    dim1, dim2, dim3 = D1, D2, D3           # default output dims (self.dim*)

    key = jax.random.PRNGKey(0)
    kx, kw, kb = jax.random.split(key, 3)
    x = jax.random.normal(kx, (B, Cin, D1, D2, D3), dtype=jnp.float32)

    # Conv3d(kernel=1) init mimicking PyTorch uniform(-k, k), k=1/sqrt(fan_in)
    bound = 1.0 / math.sqrt(Cin)
    w = jax.random.uniform(kw, (Cout, Cin), jnp.float32, -bound, bound)
    b = jax.random.uniform(kb, (Cout,), jnp.float32, -bound, bound)

    out = jax.block_until_ready(pointwise_op_3d_forward(x, w, b, dim1, dim2, dim3))
    ref = jax.block_until_ready(_reference_forward(x, w, b, dim1, dim2, dim3))
    assert out.shape == (B, Cout, dim1, dim2, dim3)
    assert float(jnp.max(jnp.abs(out - ref))) < 1e-4

    # Also exercise the MXU conv path (large channel mix: Cin*Cout > 64).
    Cin2, Cout2 = 8, 16
    kx2, kw2, kb2 = jax.random.split(jax.random.PRNGKey(1), 3)
    x2 = jax.random.normal(kx2, (B, Cin2, D1, D2, D3), dtype=jnp.float32)
    w2 = jax.random.uniform(kw2, (Cout2, Cin2), jnp.float32, -0.3, 0.3)
    b2 = jax.random.uniform(kb2, (Cout2,), jnp.float32, -0.3, 0.3)
    y2 = jax.block_until_ready(
        pointwise_conv_pallas(x2.reshape(B, Cin2, -1), w2, b2))
    ref2 = (jnp.einsum('bcs,oc->bos', x2.reshape(B, Cin2, -1), w2,
                       precision=_HIGHEST) + b2[None, :, None])
    assert float(jnp.max(jnp.abs(y2 - ref2))) < 2e-2   # MXU default f32 precision

    print("KERNEL_OK")
</pallas_src>

<mosaic_0001>
module attributes {stable_mosaic.version = 11 : i64} {
  func.func @_pw_conv_vpu_kernel(%arg0: i32, %arg1: i32, %arg2: memref<1x4x8x128xf32, #tpu.memory_space<vmem>>, %arg3: memref<6x4xf32, #tpu.memory_space<smem>>, %arg4: memref<6xf32, #tpu.memory_space<smem>>, %arg5: memref<1x6x8x128xf32, #tpu.memory_space<vmem>>) attributes {dimension_semantics = [#tpu.dimension_semantics<parallel>, #tpu.dimension_semantics<parallel>], iteration_bounds = array<i64: 2, 1>, scalar_prefetch = 0 : i64, scratch_operands = 0 : i64, tpu.core_type = #tpu.core_type<tc>, window_params = [{transform_indices = @transform_0, window_bounds = array<i64: 1, 4, 8, 128>}, {transform_indices = @transform_1, window_bounds = array<i64: 6, 4>}, {transform_indices = @transform_2, window_bounds = array<i64: 6>}, {transform_indices = @transform_3, window_bounds = array<i64: 1, 6, 8, 128>}]} {
    %c0_i32 = arith.constant 0 : i32
    %c8_i32 = arith.constant 8 : i32
    %0 = arith.muli %c0_i32, %c8_i32 : i32
    %1 = tpu.assume_multiple %0, 8 : i32
    %c0 = arith.constant 0 : index
    %c0_0 = arith.constant 0 : index
    %2 = arith.index_cast %1 : i32 to index
    %c0_1 = arith.constant 0 : index
    %3 = vector.load %arg2[%c0, %c0_0, %2, %c0_1] : memref<1x4x8x128xf32, #tpu.memory_space<vmem>>, vector<1x1x8x128xf32>
    %4 = vector.shape_cast %3 : vector<1x1x8x128xf32> to vector<8x128xf32>
    %c0_2 = arith.constant 0 : index
    %c1 = arith.constant 1 : index
    %5 = arith.index_cast %1 : i32 to index
    %c0_3 = arith.constant 0 : index
    %6 = vector.load %arg2[%c0_2, %c1, %5, %c0_3] : memref<1x4x8x128xf32, #tpu.memory_space<vmem>>, vector<1x1x8x128xf32>
    %7 = vector.shape_cast %6 : vector<1x1x8x128xf32> to vector<8x128xf32>
    %c0_4 = arith.constant 0 : index
    %c2 = arith.constant 2 : index
    %8 = arith.index_cast %1 : i32 to index
    %c0_5 = arith.constant 0 : index
    %9 = vector.load %arg2[%c0_4, %c2, %8, %c0_5] : memref<1x4x8x128xf32, #tpu.memory_space<vmem>>, vector<1x1x8x128xf32>
    %10 = vector.shape_cast %9 : vector<1x1x8x128xf32> to vector<8x128xf32>
    %c0_6 = arith.constant 0 : index
    %c3 = arith.constant 3 : index
    %11 = arith.index_cast %1 : i32 to index
    %c0_7 = arith.constant 0 : index
    %12 = vector.load %arg2[%c0_6, %c3, %11, %c0_7] : memref<1x4x8x128xf32, #tpu.memory_space<vmem>>, vector<1x1x8x128xf32>
    %13 = vector.shape_cast %12 : vector<1x1x8x128xf32> to vector<8x128xf32>
    %c0_8 = arith.constant 0 : index
    %c0_9 = arith.constant 0 : index
    %14 = memref.load %arg3[%c0_8, %c0_9] : memref<6x4xf32, #tpu.memory_space<smem>>
    %15 = vector.broadcast %14 : f32 to vector<8x128xf32>
    %16 = arith.mulf %4, %15 : vector<8x128xf32>
    %c0_10 = arith.constant 0 : index
    %17 = memref.load %arg4[%c0_10] : memref<6xf32, #tpu.memory_space<smem>>
    %18 = vector.broadcast %17 : f32 to vector<8x128xf32>
    %19 = arith.addf %16, %18 : vector<8x128xf32>
    %c0_11 = arith.constant 0 : index
    %c1_12 = arith.constant 1 : index
    %20 = memref.load %arg3[%c0_11, %c1_12] : memref<6x4xf32, #tpu.memory_space<smem>>
    %21 = vector.broadcast %20 : f32 to vector<8x128xf32>
    %22 = arith.mulf %7, %21 : vector<8x128xf32>
    %23 = arith.addf %19, %22 : vector<8x128xf32>
    %c0_13 = arith.constant 0 : index
    %c2_14 = arith.constant 2 : index
    %24 = memref.load %arg3[%c0_13, %c2_14] : memref<6x4xf32, #tpu.memory_space<smem>>
    %25 = vector.broadcast %24 : f32 to vector<8x128xf32>
    %26 = arith.mulf %10, %25 : vector<8x128xf32>
    %27 = arith.addf %23, %26 : vector<8x128xf32>
    %c0_15 = arith.constant 0 : index
    %c3_16 = arith.constant 3 : index
    %28 = memref.load %arg3[%c0_15, %c3_16] : memref<6x4xf32, #tpu.memory_space<smem>>
    %29 = vector.broadcast %28 : f32 to vector<8x128xf32>
    %30 = arith.mulf %13, %29 : vector<8x128xf32>
    %31 = arith.addf %27, %30 : vector<8x128xf32>
    %c0_17 = arith.constant 0 : index
    %c0_18 = arith.constant 0 : index
    %32 = arith.index_cast %1 : i32 to index
    %c0_19 = arith.constant 0 : index
    %33 = vector.load %arg5[%c0_17, %c0_18, %32, %c0_19] : memref<1x6x8x128xf32, #tpu.memory_space<vmem>>, vector<1x1x8x128xf32>
    %34 = vector.shape_cast %33 : vector<1x1x8x128xf32> to vector<8x128xf32>
    %35 = vector.shape_cast %31 : vector<8x128xf32> to vector<1x1x8x128xf32>
    tpu.vector_store %arg5[%c0_17, %c0_18, %32, %c0_19], %35 {strides = array<i32>} : memref<1x6x8x128xf32, #tpu.memory_space<vmem>>, vector<1x1x8x128xf32>,
    %c1_20 = arith.constant 1 : index
    %c0_21 = arith.constant 0 : index
    %36 = memref.load %arg3[%c1_20, %c0_21] : memref<6x4xf32, #tpu.memory_space<smem>>
    %37 = vector.broadcast %36 : f32 to vector<8x128xf32>
    %38 = arith.mulf %4, %37 : vector<8x128xf32>
    %c1_22 = arith.constant 1 : index
    %39 = memref.load %arg4[%c1_22] : memref<6xf32, #tpu.memory_space<smem>>
    %40 = vector.broadcast %39 : f32 to vector<8x128xf32>
    %41 = arith.addf %38, %40 : vector<8x128xf32>
    %c1_23 = arith.constant 1 : index
    %c1_24 = arith.constant 1 : index
    %42 = memref.load %arg3[%c1_23, %c1_24] : memref<6x4xf32, #tpu.memory_space<smem>>
    %43 = vector.broadcast %42 : f32 to vector<8x128xf32>
    %44 = arith.mulf %7, %43 : vector<8x128xf32>
    %45 = arith.addf %41, %44 : vector<8x128xf32>
    %c1_25 = arith.constant 1 : index
    %c2_26 = arith.constant 2 : index
    %46 = memref.load %arg3[%c1_25, %c2_26] : memref<6x4xf32, #tpu.memory_space<smem>>
    %47 = vector.broadcast %46 : f32 to vector<8x128xf32>
    %48 = arith.mulf %10, %47 : vector<8x128xf32>
    %49 = arith.addf %45, %48 : vector<8x128xf32>
    %c1_27 = arith.constant 1 : index
    %c3_28 = arith.constant 3 : index
    %50 = memref.load %arg3[%c1_27, %c3_28] : memref<6x4xf32, #tpu.memory_space<smem>>
    %51 = vector.broadcast %50 : f32 to vector<8x128xf32>
    %52 = arith.mulf %13, %51 : vector<8x128xf32>
    %53 = arith.addf %49, %52 : vector<8x128xf32>
    %c0_29 = arith.constant 0 : index
    %c1_30 = arith.constant 1 : index
    %54 = arith.index_cast %1 : i32 to index
    %c0_31 = arith.constant 0 : index
    %55 = vector.load %arg5[%c0_29, %c1_30, %54, %c0_31] : memref<1x6x8x128xf32, #tpu.memory_space<vmem>>, vector<1x1x8x128xf32>
    %56 = vector.shape_cast %55 : vector<1x1x8x128xf32> to vector<8x128xf32>
    %57 = vector.shape_cast %53 : vector<8x128xf32> to vector<1x1x8x128xf32>
    tpu.vector_store %arg5[%c0_29, %c1_30, %54, %c0_31], %57 {strides = array<i32>} : memref<1x6x8x128xf32, #tpu.memory_space<vmem>>, vector<1x1x8x128xf32>,
    %c2_32 = arith.constant 2 : index
    %c0_33 = arith.constant 0 : index
    %58 = memref.load %arg3[%c2_32, %c0_33] : memref<6x4xf32, #tpu.memory_space<smem>>
    %59 = vector.broadcast %58 : f32 to vector<8x128xf32>
    %60 = arith.mulf %4, %59 : vector<8x128xf32>
    %c2_34 = arith.constant 2 : index
    %61 = memref.load %arg4[%c2_34] : memref<6xf32, #tpu.memory_space<smem>>
    %62 = vector.broadcast %61 : f32 to vector<8x128xf32>
    %63 = arith.addf %60, %62 : vector<8x128xf32>
    %c2_35 = arith.constant 2 : index
    %c1_36 = arith.constant 1 : index
    %64 = memref.load %arg3[%c2_35, %c1_36] : memref<6x4xf32, #tpu.memory_space<smem>>
    %65 = vector.broadcast %64 : f32 to vector<8x128xf32>
    %66 = arith.mulf %7, %65 : vector<8x128xf32>
    %67 = arith.addf %63, %66 : vector<8x128xf32>
    %c2_37 = arith.constant 2 : index
    %c2_38 = arith.constant 2 : index
    %68 = memref.load %arg3[%c2_37, %c2_38] : memref<6x4xf32, #tpu.memory_space<smem>>
    %69 = vector.broadcast %68 : f32 to vector<8x128xf32>
    %70 = arith.mulf %10, %69 : vector<8x128xf32>
    %71 = arith.addf %67, %70 : vector<8x128xf32>
    %c2_39 = arith.constant 2 : index
    %c3_40 = arith.constant 3 : index
    %72 = memref.load %arg3[%c2_39, %c3_40] : memref<6x4xf32, #tpu.memory_space<smem>>
    %73 = vector.broadcast %72 : f32 to vector<8x128xf32>
    %74 = arith.mulf %13, %73 : vector<8x128xf32>
    %75 = arith.addf %71, %74 : vector<8x128xf32>
    %c0_41 = arith.constant 0 : index
    %c2_42 = arith.constant 2 : index
    %76 = arith.index_cast %1 : i32 to index
    %c0_43 = arith.constant 0 : index
    %77 = vector.load %arg5[%c0_41, %c2_42, %76, %c0_43] : memref<1x6x8x128xf32, #tpu.memory_space<vmem>>, vector<1x1x8x128xf32>
    %78 = vector.shape_cast %77 : vector<1x1x8x128xf32> to vector<8x128xf32>
    %79 = vector.shape_cast %75 : vector<8x128xf32> to vector<1x1x8x128xf32>
    tpu.vector_store %arg5[%c0_41, %c2_42, %76, %c0_43], %79 {strides = array<i32>} : memref<1x6x8x128xf32, #tpu.memory_space<vmem>>, vector<1x1x8x128xf32>,
    %c3_44 = arith.constant 3 : index
    %c0_45 = arith.constant 0 : index
    %80 = memref.load %arg3[%c3_44, %c0_45] : memref<6x4xf32, #tpu.memory_space<smem>>
    %81 = vector.broadcast %80 : f32 to vector<8x128xf32>
    %82 = arith.mulf %4, %81 : vector<8x128xf32>
    %c3_46 = arith.constant 3 : index
    %83 = memref.load %arg4[%c3_46] : memref<6xf32, #tpu.memory_space<smem>>
    %84 = vector.broadcast %83 : f32 to vector<8x128xf32>
    %85 = arith.addf %82, %84 : vector<8x128xf32>
    %c3_47 = arith.constant 3 : index
    %c1_48 = arith.constant 1 : index
    %86 = memref.load %arg3[%c3_47, %c1_48] : memref<6x4xf32, #tpu.memory_space<smem>>
    %87 = vector.broadcast %86 : f32 to vector<8x128xf32>
    %88 = arith.mulf %7, %87 : vector<8x128xf32>
    %89 = arith.addf %85, %88 : vector<8x128xf32>
    %c3_49 = arith.constant 3 : index
    %c2_50 = arith.constant 2 : index
    %90 = memref.load %arg3[%c3_49, %c2_50] : memref<6x4xf32, #tpu.memory_space<smem>>
    %91 = vector.broadcast %90 : f32 to vector<8x128xf32>
    %92 = arith.mulf %10, %91 : vector<8x128xf32>
    %93 = arith.addf %89, %92 : vector<8x128xf32>
    %c3_51 = arith.constant 3 : index
    %c3_52 = arith.constant 3 : index
    %94 = memref.load %arg3[%c3_51, %c3_52] : memref<6x4xf32, #tpu.memory_space<smem>>
    %95 = vector.broadcast %94 : f32 to vector<8x128xf32>
    %96 = arith.mulf %13, %95 : vector<8x128xf32>
    %97 = arith.addf %93, %96 : vector<8x128xf32>
    %c0_53 = arith.constant 0 : index
    %c3_54 = arith.constant 3 : index
    %98 = arith.index_cast %1 : i32 to index
    %c0_55 = arith.constant 0 : index
    %99 = vector.load %arg5[%c0_53, %c3_54, %98, %c0_55] : memref<1x6x8x128xf32, #tpu.memory_space<vmem>>, vector<1x1x8x128xf32>
    %100 = vector.shape_cast %99 : vector<1x1x8x128xf32> to vector<8x128xf32>
    %101 = vector.shape_cast %97 : vector<8x128xf32> to vector<1x1x8x128xf32>
    tpu.vector_store %arg5[%c0_53, %c3_54, %98, %c0_55], %101 {strides = array<i32>} : memref<1x6x8x128xf32, #tpu.memory_space<vmem>>, vector<1x1x8x128xf32>,
    %c4 = arith.constant 4 : index
    %c0_56 = arith.constant 0 : index
    %102 = memref.load %arg3[%c4, %c0_56] : memref<6x4xf32, #tpu.memory_space<smem>>
    %103 = vector.broadcast %102 : f32 to vector<8x128xf32>
    %104 = arith.mulf %4, %103 : vector<8x128xf32>
    %c4_57 = arith.constant 4 : index
    %105 = memref.load %arg4[%c4_57] : memref<6xf32, #tpu.memory_space<smem>>
    %106 = vector.broadcast %105 : f32 to vector<8x128xf32>
    %107 = arith.addf %104, %106 : vector<8x128xf32>
    %c4_58 = arith.constant 4 : index
    %c1_59 = arith.constant 1 : index
    %108 = memref.load %arg3[%c4_58, %c1_59] : memref<6x4xf32, #tpu.memory_space<smem>>
    %109 = vector.broadcast %108 : f32 to vector<8x128xf32>
    %110 = arith.mulf %7, %109 : vector<8x128xf32>
    %111 = arith.addf %107, %110 : vector<8x128xf32>
    %c4_60 = arith.constant 4 : index
    %c2_61 = arith.constant 2 : index
    %112 = memref.load %arg3[%c4_60, %c2_61] : memref<6x4xf32, #tpu.memory_space<smem>>
    %113 = vector.broadcast %112 : f32 to vector<8x128xf32>
    %114 = arith.mulf %10, %113 : vector<8x128xf32>
    %115 = arith.addf %111, %114 : vector<8x128xf32>
    %c4_62 = arith.constant 4 : index
    %c3_63 = arith.constant 3 : index
    %116 = memref.load %arg3[%c4_62, %c3_63] : memref<6x4xf32, #tpu.memory_space<smem>>
    %117 = vector.broadcast %116 : f32 to vector<8x128xf32>
    %118 = arith.mulf %13, %117 : vector<8x128xf32>
    %119 = arith.addf %115, %118 : vector<8x128xf32>
    %c0_64 = arith.constant 0 : index
    %c4_65 = arith.constant 4 : index
    %120 = arith.index_cast %1 : i32 to index
    %c0_66 = arith.constant 0 : index
    %121 = vector.load %arg5[%c0_64, %c4_65, %120, %c0_66] : memref<1x6x8x128xf32, #tpu.memory_space<vmem>>, vector<1x1x8x128xf32>
    %122 = vector.shape_cast %121 : vector<1x1x8x128xf32> to vector<8x128xf32>
    %123 = vector.shape_cast %119 : vector<8x128xf32> to vector<1x1x8x128xf32>
    tpu.vector_store %arg5[%c0_64, %c4_65, %120, %c0_66], %123 {strides = array<i32>} : memref<1x6x8x128xf32, #tpu.memory_space<vmem>>, vector<1x1x8x128xf32>,
    %c5 = arith.constant 5 : index
    %c0_67 = arith.constant 0 : index
    %124 = memref.load %arg3[%c5, %c0_67] : memref<6x4xf32, #tpu.memory_space<smem>>
    %125 = vector.broadcast %124 : f32 to vector<8x128xf32>
    %126 = arith.mulf %4, %125 : vector<8x128xf32>
    %c5_68 = arith.constant 5 : index
    %127 = memref.load %arg4[%c5_68] : memref<6xf32, #tpu.memory_space<smem>>
    %128 = vector.broadcast %127 : f32 to vector<8x128xf32>
    %129 = arith.addf %126, %128 : vector<8x128xf32>
    %c5_69 = arith.constant 5 : index
    %c1_70 = arith.constant 1 : index
    %130 = memref.load %arg3[%c5_69, %c1_70] : memref<6x4xf32, #tpu.memory_space<smem>>
    %131 = vector.broadcast %130 : f32 to vector<8x128xf32>
    %132 = arith.mulf %7, %131 : vector<8x128xf32>
    %133 = arith.addf %129, %132 : vector<8x128xf32>
    %c5_71 = arith.constant 5 : index
    %c2_72 = arith.constant 2 : index
    %134 = memref.load %arg3[%c5_71, %c2_72] : memref<6x4xf32, #tpu.memory_space<smem>>
    %135 = vector.broadcast %134 : f32 to vector<8x128xf32>
    %136 = arith.mulf %10, %135 : vector<8x128xf32>
    %137 = arith.addf %133, %136 : vector<8x128xf32>
    %c5_73 = arith.constant 5 : index
    %c3_74 = arith.constant 3 : index
    %138 = memref.load %arg3[%c5_73, %c3_74] : memref<6x4xf32, #tpu.memory_space<smem>>
    %139 = vector.broadcast %138 : f32 to vector<8x128xf32>
    %140 = arith.mulf %13, %139 : vector<8x128xf32>
    %141 = arith.addf %137, %140 : vector<8x128xf32>
    %c0_75 = arith.constant 0 : index
    %c5_76 = arith.constant 5 : index
    %142 = arith.index_cast %1 : i32 to index
    %c0_77 = arith.constant 0 : index
    %143 = vector.load %arg5[%c0_75, %c5_76, %142, %c0_77] : memref<1x6x8x128xf32, #tpu.memory_space<vmem>>, vector<1x1x8x128xf32>
    %144 = vector.shape_cast %143 : vector<1x1x8x128xf32> to vector<8x128xf32>
    %145 = vector.shape_cast %141 : vector<8x128xf32> to vector<1x1x8x128xf32>
    tpu.vector_store %arg5[%c0_75, %c5_76, %142, %c0_77], %145 {strides = array<i32>} : memref<1x6x8x128xf32, #tpu.memory_space<vmem>>, vector<1x1x8x128xf32>,
    %c1_i32 = arith.constant 1 : i32
    return
  }
  func.func @transform_0(%arg0: i32, %arg1: i32) -> (i32, i32, i32, i32) {
    %c0_i32 = arith.constant 0 : i32
    %c0_i32_0 = arith.constant 0 : i32
    %c0_i32_1 = arith.constant 0 : i32
    return %arg0, %c0_i32, %arg1, %c0_i32_0 : i32, i32, i32, i32
  }
  func.func @transform_1(%arg0: i32, %arg1: i32) -> (i32, i32) {
    %c0_i32 = arith.constant 0 : i32
    %c0_i32_0 = arith.constant 0 : i32
    %c0_i32_1 = arith.constant 0 : i32
    return %c0_i32, %c0_i32_0 : i32, i32
  }
  func.func @transform_2(%arg0: i32, %arg1: i32) -> i32 {
    %c0_i32 = arith.constant 0 : i32
    %c0_i32_0 = arith.constant 0 : i32
    return %c0_i32 : i32
  }
  func.func @transform_3(%arg0: i32, %arg1: i32) -> (i32, i32, i32, i32) {
    %c0_i32 = arith.constant 0 : i32
    %c0_i32_0 = arith.constant 0 : i32
    %c0_i32_1 = arith.constant 0 : i32
    return %arg0, %c0_i32, %arg1, %c0_i32_0 : i32, i32, i32, i32
  }
}

</mosaic_0001>

<llo_original>
// kernel: tpu_custom_call.1
$region0: #{tpu_custom_call.1}
  #allocation0 [shape = 'u32[]', space=smem, size = 0x4, offset = 0x4, fixed_abs, tag = 'smem constant byte address 0x4 - core index']
  #allocation1 [shape = 'u32[144,128]{1,0:T(1,128)}', space=vmem, size = 0x12000, scoped, tag = 'internal scratch']
  %s0 = inlined_call_operand.hbm [shape: f32[2,4,8,128], index: 0, kind: input, shape index: {}]
  %s1 = inlined_call_operand.vmem [shape: f32[6,4], index: 1, kind: input, shape index: {}]
  %s2 = inlined_call_operand.vmem [shape: f32[6], index: 2, kind: input, shape index: {}]
  %s3 = inlined_call_operand.hbm [shape: f32[2,6,8,128], index: 3, kind: output, shape index: {}]
  %s4 = sld [smem:[#allocation0]]
  $region57: #{tpu_custom_call.1} parent=0
    _
  %s6 = ssub.s32 1, %s4
  %s7 = scalar_select 0, %s6, %s4
  $region1: #{tpu_custom_call.1} parent=0
    #allocation2 [shape = 'u8[32768]{0}', space=vmem, size = 0x8000, scoped, tag = 'input window, operand 0']
    #allocation3 [shape = 's32[2]{0}', space=sflag, size = 0x8, scoped, tag = 'scoped memory for tpu_custom_call.1']
    #allocation4 [shape = 's32[2]{0}', space=sflag, size = 0x8, scoped, tag = 'scoped memory for tpu_custom_call.1']
    #allocation5 [shape = 's32[2]{0}', space=sflag, size = 0x8, scoped, tag = 'scoped memory for tpu_custom_call.1']
    #allocation6 [shape = 'u8[4096]{0}', space=smem, size = 0x1000, scoped, tag = 'input window, operand 1, single buffered']
    #allocation7 [shape = 'u8[512]{0}', space=smem, size = 0x200, scoped, tag = 'input window, operand 2, single buffered']
    #allocation8 [shape = 's32[1]{0}', space=sflag, size = 0x4, scoped, tag = 'scoped memory for tpu_custom_call.1']
    #allocation9 [shape = 'u8[49152]{0}', space=vmem, size = 0xc000, scoped, tag = 'output window, operand 0']
    %8 = vsyncpa [#allocation3], 0
    %s9 = scalar_lea.sflag [#allocation3], 1
    %10 = vsyncpa %s9, 0
    %11 = vsyncpa [#allocation5], 0
    %12 = vsyncpa [#allocation8], 0
    %13 = vsyncpa [#allocation4], 0
    %s14 = scalar_lea.sflag [#allocation4], 1
    %15 = vsyncpa %s14, 0
    loop: start=0, step=1, limit=4
    $region2: #{tpu_custom_call.1} parent=1 // loop_pre_header
      _
    $region3: #{tpu_custom_call.1} parent=1 // loop_header
      %s17 = sphi 0, %s21
      %p18 = scmp.ge.s32.totalorder %s17, 4
      %s24 = sphi 0, %s36
      %s25 = sphi 0, %s32
      %s26 = sphi 0, %s24
      %s27 = sphi 0, %s25
      %s28 = sphi 0, %s26
      %s29 = sphi 0, %s27
      %s41 = sphi 0, %s43
      %s44 = sphi 0, %s41
      %s45 = sphi 0, %s44
      %s61 = sphi 0, %s45
      %s65 = sphi 0, %s65
      %s67 = sphi 0, %s65
      %s68 = sphi 0, %s67
      %s82 = sphi 0, %s68
      %s86 = sphi 0, %s86
      %s88 = sphi 0, %s86
      %s89 = sphi 0, %s88
      %s103 = sphi 0, %s89
      %s111 = sphi 0, %s113
      %s114 = sphi 0, %s111
      %s115 = sphi 0, %s114
      %s131 = sphi 0, %s115
    $region4: #{tpu_custom_call.1} parent=1 // loop_header_branch
      %20 = sbr.rel (%p18) target = $region8
    $region5: #{tpu_custom_call.1} parent=1 // loop_body
      %s22 = ssub.s32 %s17, 1
      %s23 = ssub.s32 %s17, 2
      %s30 = sadd.s32 1, %s25
      %p31 = scmp.ge.s32.totalorder %s30, 1
      %s32 = scalar_select %p31, 0, %s30
      %s33 = sadd.s32 1, %s24
      %s34 = scalar_select %p31, %s33, %s24
      %p35 = scmp.ge.s32.totalorder %s34, 2
      %s36 = scalar_select %p35, 0, %s34
      %s37 = ssub.s32 %s24, %s36
      %s38 = ssub.s32 %s25, %s32
      %s39 = sor.u32 %s37, %s38
      %p40 = scmp.eq.s32.totalorder %s39, 0
      %s42 = sadd.s32 %s41, 1
      %s43 = scalar_select %p40, %s41, %s42
      %p46 = pneg %p40
      %p47 = scmp.eq.s32.totalorder %s17, 1
      %p48 = por %p46, %p47
      %p49 = scmp.ne.s32.totalorder %s41, %s44
      %p50 = scmp.eq.s32.totalorder %s17, 0
      %p51 = por %p49, %p50
      %p52 = scmp.ne.s32.totalorder %s41, %s44
      %p53 = scmp.eq.s32.totalorder %s22, 1
      %p54 = por %p52, %p53
      %p55 = scmp.ne.s32.totalorder %s44, %s45
      %p56 = scmp.eq.s32.totalorder %s22, 0
      %p57 = por %p55, %p56
      %p58 = scmp.ne.s32.totalorder %s44, %s45
      %p59 = scmp.eq.s32.totalorder %s23, 1
      %p60 = por %p58, %p59
      %p62 = scmp.ne.s32.totalorder %s45, %s61
      %p63 = scmp.eq.s32.totalorder %s23, 0
      %p64 = por %p62, %p63
      %s66 = sadd.s32 %s65, 1
      %p69 = scmp.eq.s32.totalorder %s17, 1
      %p70 = scmp.ne.s32.totalorder %s65, %s67
      %p71 = scmp.eq.s32.totalorder %s17, 0
      %p72 = por %p70, %p71
      %p73 = scmp.ne.s32.totalorder %s65, %s67
      %p74 = scmp.eq.s32.totalorder %s22, 1
      %p75 = por %p73, %p74
      %p76 = scmp.ne.s32.totalorder %s67, %s68
      %p77 = scmp.eq.s32.totalorder %s22, 0
      %p78 = por %p76, %p77
      %p79 = scmp.ne.s32.totalorder %s67, %s68
      %p80 = scmp.eq.s32.totalorder %s23, 1
      %p81 = por %p79, %p80
      %p83 = scmp.ne.s32.totalorder %s68, %s82
      %p84 = scmp.eq.s32.totalorder %s23, 0
      %p85 = por %p83, %p84
      %s87 = sadd.s32 %s86, 1
      %p90 = scmp.eq.s32.totalorder %s17, 1
      %p91 = scmp.ne.s32.totalorder %s86, %s88
      %p92 = scmp.eq.s32.totalorder %s17, 0
      %p93 = por %p91, %p92
      %p94 = scmp.ne.s32.totalorder %s86, %s88
      %p95 = scmp.eq.s32.totalorder %s22, 1
      %p96 = por %p94, %p95
      %p97 = scmp.ne.s32.totalorder %s88, %s89
      %p98 = scmp.eq.s32.totalorder %s22, 0
      %p99 = por %p97, %p98
      %p100 = scmp.ne.s32.totalorder %s88, %s89
      %p101 = scmp.eq.s32.totalorder %s23, 1
      %p102 = por %p100, %p101
      %p104 = scmp.ne.s32.totalorder %s89, %s103
      %p105 = scmp.eq.s32.totalorder %s23, 0
      %p106 = por %p104, %p105
      %s107 = ssub.s32 %s24, %s36
      %s108 = ssub.s32 %s25, %s32
      %s109 = sor.u32 %s107, %s108
      %p110 = scmp.eq.s32.totalorder %s109, 0
      %s112 = sadd.s32 %s111, 1
      %s113 = scalar_select %p110, %s111, %s112
      %p116 = pneg %p110
      %p117 = scmp.eq.s32.totalorder %s17, 1
      %p118 = por %p116, %p117
      %p119 = scmp.ne.s32.totalorder %s111, %s114
      %p120 = scmp.eq.s32.totalorder %s17, 0
      %p121 = por %p119, %p120
      %p122 = scmp.ne.s32.totalorder %s111, %s114
      %p123 = scmp.eq.s32.totalorder %s22, 1
      %p124 = por %p122, %p123
      %p125 = scmp.ne.s32.totalorder %s114, %s115
      %p126 = scmp.eq.s32.totalorder %s22, 0
      %p127 = por %p125, %p126
      %p128 = scmp.ne.s32.totalorder %s114, %s115
      %p129 = scmp.eq.s32.totalorder %s23, 1
      %p130 = por %p128, %p129
      %p132 = scmp.ne.s32.totalorder %s115, %s131
      %p133 = scmp.eq.s32.totalorder %s23, 0
      %p134 = por %p132, %p133
      %p135 = scmp.le.s32.totalorder 1, %s17
      %p136 = scmp.lt.s32.totalorder %s17, 3
      %p137 = pnand %p135, %p136
      %p138 = pneg %p137
      // Predicated region
      $region9: #{tpu_custom_call.1} parent=5 // pred_check
        _
      $region10: #{tpu_custom_call.1} parent=5 // pred_check_branch
        %140 = sbr.rel (%p137) target = $region12
      $region11: #{tpu_custom_call.1} parent=5 // pred_region
        %s141 = ssub.s32 %s17, 1
        // Predicated region
        $region13: #{tpu_custom_call.1} parent=11 // pred_check
          %p142 = pneg %p78
        $region14: #{tpu_custom_call.1} parent=11 // pred_check_branch
          %144 = sbr.rel (%p142) target = $region16
        $region15: #{tpu_custom_call.1} parent=11 // pred_region
          %s146 = ssub.s32 128, 128
          %147 = vsyncadd [#allocation5], %s146
          %s149 = sshll.u32 %s1, 4
          %s150 = int_to_ptr.vmem [resolvable:$true] %s149
          %152 = dma.vmem_to_smem %s150, 128, [#allocation6], [#allocation5]
        $region16: #{tpu_custom_call.1} parent=11 // pred_fallthru
          _
        // Predicated region
        $region17: #{tpu_custom_call.1} parent=11 // pred_check
          %p153 = pneg %p99
        $region18: #{tpu_custom_call.1} parent=11 // pred_check_branch
          %155 = sbr.rel (%p153) target = $region20
        $region19: #{tpu_custom_call.1} parent=11 // pred_region
          %s157 = ssub.s32 16, 16
          %158 = vsyncadd [#allocation8], %s157
          %s160 = sshll.u32 %s2, 4
          %s161 = int_to_ptr.vmem [resolvable:$true] %s160
          %163 = dma.vmem_to_smem %s161, 16, [#allocation7], [#allocation8]
        $region20: #{tpu_custom_call.1} parent=11 // pred_fallthru
          _
      $region12: #{tpu_custom_call.1} parent=5 // pred_fallthru
        _
      %p164 = scmp.lt.s32.totalorder %s17, 2
      // Predicated region
      $region21: #{tpu_custom_call.1} parent=5 // pred_check
        %p165 = pneg %p164
      $region22: #{tpu_custom_call.1} parent=5 // pred_check_branch
        %167 = sbr.rel (%p165) target = $region24
      $region23: #{tpu_custom_call.1} parent=5 // pred_region
        // Predicated region
        $region25: #{tpu_custom_call.1} parent=23 // pred_check
          %p168 = pneg %p51
        $region26: #{tpu_custom_call.1} parent=23 // pred_check_branch
          %170 = sbr.rel (%p168) target = $region28
        $region27: #{tpu_custom_call.1} parent=23 // pred_region
          %s171 = sand.u32 %s41, 1
          %s172 = scalar_lea.sflag [#allocation3], %s171
          %s173 = sand.u32 %s41, 1
          %s174 = smul.addr %s173, 32
          %s175 = scalar_lea.vmem [#allocation2], %s174
          %s177 = ssub.s32 512, 512
          %178 = vsyncadd %s172, %s177
          %s179 = smul.addr %s24, 4
          %s180 = sadd.s32 %s25, %s179
          %s181 = smul.addr %s180, 128
          %s182 = scalar_lea.hbm %s0, %s181
          %s183 = sshll.u32 %s175, 4
          %s184 = int_to_ptr.vmem [resolvable:$true] %s183
          %189 = dma.hbm_to_vmem [thread:$0]  %s182, 512, %s184, %s172, 128, 128, 8
        $region28: #{tpu_custom_call.1} parent=23 // pred_fallthru
          _
      $region24: #{tpu_custom_call.1} parent=5 // pred_fallthru
        _
      %p190 = scmp.le.s32.totalorder 1, %s17
      %p191 = scmp.lt.s32.totalorder %s17, 3
      %p192 = pnand %p190, %p191
      %p193 = pneg %p192
      // Predicated region
      $region29: #{tpu_custom_call.1} parent=5 // pred_check
        _
      $region30: #{tpu_custom_call.1} parent=5 // pred_check_branch
        %195 = sbr.rel (%p192) target = $region32
      $region31: #{tpu_custom_call.1} parent=5 // pred_region
        %s196 = ssub.s32 %s17, 1
        %s197 = sand.u32 %s44, 1
        %s198 = scalar_lea.sflag [#allocation3], %s197
        %s199 = sand.u32 %s44, 1
        %s200 = smul.addr %s199, 32
        %s201 = scalar_lea.vmem [#allocation2], %s200
        // Predicated region
        $region33: #{tpu_custom_call.1} parent=31 // pred_check
          %p202 = pneg %p57
        $region34: #{tpu_custom_call.1} parent=31 // pred_check_branch
          %204 = sbr.rel (%p202) target = $region36
        $region35: #{tpu_custom_call.1} parent=31 // pred_region
          %205 = dma.done %s198, 512
        $region36: #{tpu_custom_call.1} parent=31 // pred_fallthru
          _
        // Predicated region
        $region37: #{tpu_custom_call.1} parent=31 // pred_check
          %p206 = pneg %p78
        $region38: #{tpu_custom_call.1} parent=31 // pred_check_branch
          %208 = sbr.rel (%p206) target = $region40
        $region39: #{tpu_custom_call.1} parent=31 // pred_region
          %209 = dma.done [#allocation5], 128
        $region40: #{tpu_custom_call.1} parent=31 // pred_fallthru
          _
        // Predicated region
        $region41: #{tpu_custom_call.1} parent=31 // pred_check
          %p210 = pneg %p99
        $region42: #{tpu_custom_call.1} parent=31 // pred_check_branch
          %212 = sbr.rel (%p210) target = $region44
        $region43: #{tpu_custom_call.1} parent=31 // pred_region
          %213 = dma.done [#allocation8], 16
        $region44: #{tpu_custom_call.1} parent=31 // pred_fallthru
          _
        %214 = sfence
        %s215 = sand.u32 %s44, 1
        %s216 = scalar_lea.sflag [#allocation3], %s215
        %s217 = sand.u32 %s44, 1
        %s218 = smul.addr %s217, 32
        %s219 = scalar_lea.vmem [#allocation2], %s218
        %p220 = pneg %p57
        %p221 = pneg %p54
        %p222 = pneg %p78
        %p223 = pneg %p75
        %p224 = pneg %p99
        %p225 = pneg %p96
        %p226 = pneg %p127
        %p227 = pneg %p124
        %s228 = sand.u32 %s114, 1
        %s229 = scalar_lea.sflag [#allocation4], %s228
        %s230 = sand.u32 %s114, 1
        %s231 = smul.addr %s230, 48
        %s232 = scalar_lea.vmem [#allocation9], %s231
        %v233 = vld [vmem:[%s201] sm:$0xff]
        %s234 = sadd.s32 0, 8
        %s235 = scalar_lea.vmem %s201, %s234 [#allocation2]
        %v236 = vld [vmem:[%s235] sm:$0xff]
        %s237 = sadd.s32 0, 16
        %s238 = scalar_lea.vmem %s201, %s237 [#allocation2]
        %v239 = vld [vmem:[%s238] sm:$0xff]
        %s240 = sadd.s32 0, 24
        %s241 = scalar_lea.vmem %s201, %s240 [#allocation2]
        %v242 = vld [vmem:[%s241] sm:$0xff]
        %s243 = sld [smem:[#allocation6]]
        %v244 = vstv %s243
        %v245 = vmul.f32 %v233, %v244
        %s246 = sld [smem:[#allocation7]]
        %v247 = vstv %s246
        %v248 = vadd.f32 %v245, %v247
        %s249 = sld [smem:[#allocation6 + $0x1]]
        %v250 = vstv %s249
        %v251 = vmul.f32 %v236, %v250
        %v252 = vadd.f32 %v248, %v251
        %s253 = sld [smem:[#allocation6 + $0x2]]
        %v254 = vstv %s253
        %v255 = vmul.f32 %v239, %v254
        %v256 = vadd.f32 %v252, %v255
        %s257 = sld [smem:[#allocation6 + $0x3]]
        %v258 = vstv %s257
        %v259 = vmul.f32 %v242, %v258
        %v260 = vadd.f32 %v256, %v259
        %261 = vst [vmem:[%s232] sm:$0xff] %v260
        %s262 = sld [smem:[#allocation6 + $0x80]]
        %v263 = vstv %s262
        %v264 = vmul.f32 %v233, %v263
        %s265 = sld [smem:[#allocation7 + $0x1]]
        %v266 = vstv %s265
        %v267 = vadd.f32 %v264, %v266
        %s268 = sld [smem:[#allocation6 + $0x81]]
        %v269 = vstv %s268
        %v270 = vmul.f32 %v236, %v269
        %v271 = vadd.f32 %v267, %v270
        %s272 = sld [smem:[#allocation6 + $0x82]]
        %v273 = vstv %s272
        %v274 = vmul.f32 %v239, %v273
        %v275 = vadd.f32 %v271, %v274
        %s276 = sld [smem:[#allocation6 + $0x83]]
        %v277 = vstv %s276
        %v278 = vmul.f32 %v242, %v277
        %v279 = vadd.f32 %v275, %v278
        %s280 = scalar_lea.vmem %s232, %s234 [#allocation9]
        %281 = vst [vmem:[%s280] sm:$0xff] %v279
        %s282 = sld [smem:[#allocation6 + $0x100]]
        %v283 = vstv %s282
        %v284 = vmul.f32 %v233, %v283
        %s285 = sld [smem:[#allocation7 + $0x2]]
        %v286 = vstv %s285
        %v287 = vadd.f32 %v284, %v286
        %s288 = sld [smem:[#allocation6 + $0x101]]
        %v289 = vstv %s288
        %v290 = vmul.f32 %v236, %v289
        %v291 = vadd.f32 %v287, %v290
        %s292 = sld [smem:[#allocation6 + $0x102]]
        %v293 = vstv %s292
        %v294 = vmul.f32 %v239, %v293
        %v295 = vadd.f32 %v291, %v294
        %s296 = sld [smem:[#allocation6 + $0x103]]
        %v297 = vstv %s296
        %v298 = vmul.f32 %v242, %v297
        %v299 = vadd.f32 %v295, %v298
        %s300 = scalar_lea.vmem %s232, %s237 [#allocation9]
        %301 = vst [vmem:[%s300] sm:$0xff] %v299
        %s302 = sld [smem:[#allocation6 + $0x180]]
        %v303 = vstv %s302
        %v304 = vmul.f32 %v233, %v303
        %s305 = sld [smem:[#allocation7 + $0x3]]
        %v306 = vstv %s305
        %v307 = vadd.f32 %v304, %v306
        %s308 = sld [smem:[#allocation6 + $0x181]]
        %v309 = vstv %s308
        %v310 = vmul.f32 %v236, %v309
        %v311 = vadd.f32 %v307, %v310
        %s312 = sld [smem:[#allocation6 + $0x182]]
        %v313 = vstv %s312
        %v314 = vmul.f32 %v239, %v313
        %v315 = vadd.f32 %v311, %v314
        %s316 = sld [smem:[#allocation6 + $0x183]]
        %v317 = vstv %s316
        %v318 = vmul.f32 %v242, %v317
        %v319 = vadd.f32 %v315, %v318
        %s320 = scalar_lea.vmem %s232, %s240 [#allocation9]
        %321 = vst [vmem:[%s320] sm:$0xff] %v319
        %s322 = sld [smem:[#allocation6 + $0x200]]
        %v323 = vstv %s322
        %v324 = vmul.f32 %v233, %v323
        %s325 = sld [smem:[#allocation7 + $0x4]]
        %v326 = vstv %s325
        %v327 = vadd.f32 %v324, %v326
        %s328 = sld [smem:[#allocation6 + $0x201]]
        %v329 = vstv %s328
        %v330 = vmul.f32 %v236, %v329
        %v331 = vadd.f32 %v327, %v330
        %s332 = sld [smem:[#allocation6 + $0x202]]
        %v333 = vstv %s332
        %v334 = vmul.f32 %v239, %v333
        %v335 = vadd.f32 %v331, %v334
        %s336 = sld [smem:[#allocation6 + $0x203]]
        %v337 = vstv %s336
        %v338 = vmul.f32 %v242, %v337
        %v339 = vadd.f32 %v335, %v338
        %s340 = sadd.s32 0, 32
        %s341 = scalar_lea.vmem %s232, %s340 [#allocation9]
        %342 = vst [vmem:[%s341] sm:$0xff] %v339
        %s343 = sld [smem:[#allocation6 + $0x280]]
        %v344 = vstv %s343
        %v345 = vmul.f32 %v233, %v344
        %s346 = sld [smem:[#allocation7 + $0x5]]
        %v347 = vstv %s346
        %v348 = vadd.f32 %v345, %v347
        %s349 = sld [smem:[#allocation6 + $0x281]]
        %v350 = vstv %s349
        %v351 = vmul.f32 %v236, %v350
        %v352 = vadd.f32 %v348, %v351
        %s353 = sld [smem:[#allocation6 + $0x282]]
        %v354 = vstv %s353
        %v355 = vmul.f32 %v239, %v354
        %v356 = vadd.f32 %v352, %v355
        %s357 = sld [smem:[#allocation6 + $0x283]]
        %v358 = vstv %s357
        %v359 = vmul.f32 %v242, %v358
        %v360 = vadd.f32 %v356, %v359
        %s361 = sadd.s32 0, 40
        %s362 = scalar_lea.vmem %s232, %s361 [#allocation9]
        %363 = vst [vmem:[%s362] sm:$0xff] %v360
        %s364 = sand.u32 %s114, 1
        %s365 = scalar_lea.sflag [#allocation4], %s364
        %s366 = sand.u32 %s114, 1
        %s367 = smul.addr %s366, 48
        %s368 = scalar_lea.vmem [#allocation9], %s367
        // Predicated region
        $region45: #{tpu_custom_call.1} parent=31 // pred_check
          %p369 = pneg %p124
        $region46: #{tpu_custom_call.1} parent=31 // pred_check_branch
          %371 = sbr.rel (%p369) target = $region48
        $region47: #{tpu_custom_call.1} parent=31 // pred_region
          %s373 = ssub.s32 768, 768
          %374 = vsyncadd %s365, %s373
          %s375 = smul.addr %s26, 6
          %s376 = sadd.s32 %s27, %s375
          %s377 = smul.addr %s376, 128
          %s378 = scalar_lea.hbm %s3, %s377
          %s379 = sshll.u32 %s368, 4
          %s380 = int_to_ptr.vmem [resolvable:$true] %s379
          %385 = dma.vmem_to_hbm [thread:$0]  %s380, 768, %s378, %s365, 128, 128, 8
        $region48: #{tpu_custom_call.1} parent=31 // pred_fallthru
          _
      $region32: #{tpu_custom_call.1} parent=5 // pred_fallthru
        _
      %p386 = scmp.le.s32.totalorder 2, %s17
      // Predicated region
      $region49: #{tpu_custom_call.1} parent=5 // pred_check
        %p387 = pneg %p386
      $region50: #{tpu_custom_call.1} parent=5 // pred_check_branch
        %389 = sbr.rel (%p387) target = $region52
      $region51: #{tpu_custom_call.1} parent=5 // pred_region
        %s390 = ssub.s32 %s17, 2
        // Predicated region
        $region53: #{tpu_custom_call.1} parent=51 // pred_check
          %p391 = pneg %p130
        $region54: #{tpu_custom_call.1} parent=51 // pred_check_branch
          %393 = sbr.rel (%p391) target = $region56
        $region55: #{tpu_custom_call.1} parent=51 // pred_region
          %s394 = sand.u32 %s115, 1
          %s395 = scalar_lea.sflag [#allocation4], %s394
          %s396 = sand.u32 %s115, 1
          %s397 = smul.addr %s396, 48
          %s398 = scalar_lea.vmem [#allocation9], %s397
          %399 = dma.done %s395, 768
        $region56: #{tpu_custom_call.1} parent=51 // pred_fallthru
          _
      $region52: #{tpu_custom_call.1} parent=5 // pred_fallthru
        _
    $region6: #{tpu_custom_call.1} parent=1 // loop_footer
      %s21 = sadd.s32 1, %s17
    $region7: #{tpu_custom_call.1} parent=1 // loop_footer_branch
      %16 = sbr.rel target = $region3
    $region8: #{tpu_custom_call.1} parent=1 // loop_exit
      _
    %400 = vsyncpa [#allocation3], 1
    %s401 = scalar_lea.sflag [#allocation3], 1
    %402 = vsyncpa %s401, 1
    %403 = vsyncpa [#allocation4], 1
    %s404 = scalar_lea.sflag [#allocation4], 1
    %405 = vsyncpa %s404, 1
    %406 = vsyncpa [#allocation5], 1
    %s407 = scalar_lea.sflag [#allocation5], 1
    %408 = vsyncpa %s407, 1
    %409 = vsyncpa [#allocation8], 1

</llo_original>
